<compile_context>
chip_gen: v7x
topology: tpu7x:2x2x1
jax: 0.10.0
libtpu: 0.0.40
codegen_flags: <defaults>
</compile_context>

<pallas_src>
import math
from functools import partial

import jax
import jax.numpy as jnp
from jax import lax
from jax.experimental import pallas as pl
from jax.experimental.pallas import tpu as pltpu


def _choose_tile(n, cap):
    """Largest tile <= cap dividing n; prefer multiples of 128, then 8."""
    if n <= cap:
        return n
    best8 = None
    for t in range(cap, 7, -1):
        if n % t == 0:
            if t % 128 == 0:
                return t
            if best8 is None and t % 8 == 0:
                best8 = t
    if best8 is not None:
        return best8
    # TODO(synk): pad N (with key masking in the softmax) for awkward sequence lengths.
    raise ValueError(f"no tile <= {cap} dividing {n} that is a multiple of 8")


def _pick_vmem_limit():
    """Per-generation scoped-VMEM budget with a safe fallback."""
    try:
        info = pltpu.get_tpu_info()
        phys = getattr(info, "vmem_capacity_bytes", None)
        if phys:
            return int(min(phys * 0.6, 100 * 1024 * 1024))
    except Exception:
        pass
    return 32 * 1024 * 1024   # safe default on v5e / v6e / v7x


# --------------------------------------------------------------------------------------
# Kernel 1: fused per-head QKV projection.  One MXU dot per x tile.
#   x_ref  : [tn, d]    bf16
#   w_ref  : [d, 5E]    bf16   (scale*wq1 | scale*wq2 | wk1 | wk2 | wv)
#   b_ref  : [1, 5E]    f32
#   q_ref  : [tn, 2E]   bf16 out (scaled q1|q2)
#   k_ref  : [tn, 2E]   bf16 out (k1|k2)
#   v_ref  : [tn, E]    bf16 out
# --------------------------------------------------------------------------------------
def _proj_kernel(E, x_ref, w_ref, b_ref, q_ref, k_ref, v_ref):
    y = jnp.dot(x_ref[...], w_ref[...], preferred_element_type=jnp.float32) + b_ref[...]
    q_ref[...] = y[:, : 2 * E].astype(jnp.bfloat16)
    k_ref[...] = y[:, 2 * E: 4 * E].astype(jnp.bfloat16)
    v_ref[...] = y[:, 4 * E:].astype(jnp.bfloat16)


# --------------------------------------------------------------------------------------
# Kernel 2: flash-style differential attention + head-accumulated output projection.
# grid = (b, q_tiles, h, kv_tiles);  h and kv are "arbitrary" (accumulator axes).
# --------------------------------------------------------------------------------------
def _flash_diff_kernel(E, lam_ref, q_ref, k_ref, v_ref, wo_ref, bo_ref, out_ref,
                       acc_ref, m1_ref, l1_ref, a1_ref, m2_ref, l2_ref, a2_ref):
    h_idx = pl.program_id(2)
    kv_idx = pl.program_id(3)
    tq = q_ref.shape[0]

    @pl.when(kv_idx == 0)
    def _():
        m1_ref[...] = jnp.full_like(m1_ref, -jnp.inf)
        m2_ref[...] = jnp.full_like(m2_ref, -jnp.inf)
        l1_ref[...] = jnp.zeros_like(l1_ref)
        l2_ref[...] = jnp.zeros_like(l2_ref)
        a1_ref[...] = jnp.zeros_like(a1_ref)
        a2_ref[...] = jnp.zeros_like(a2_ref)

    q = q_ref[...]                       # [tq, 2E]  bf16 (1/sqrt(d) pre-folded)
    k = k_ref[...]                       # [tkv, 2E] bf16
    v = v_ref[...]                       # [tkv, E]  bf16

    # Contract the E dims directly (no explicit K transpose / XLU pass).
    dn = (((1,), (1,)), ((), ()))
    s1 = lax.dot_general(q[:, :E], k[:, :E], dn, preferred_element_type=jnp.float32)
    s2 = lax.dot_general(q[:, E:], k[:, E:], dn, preferred_element_type=jnp.float32)

    m1_old = m1_ref[...]
    m2_old = m2_ref[...]
    m1_new = jnp.maximum(m1_old, s1.max(axis=-1, keepdims=True))
    m2_new = jnp.maximum(m2_old, s2.max(axis=-1, keepdims=True))
    alpha1 = jnp.exp(m1_old - m1_new)
    alpha2 = jnp.exp(m2_old - m2_new)
    p1 = jnp.exp(s1 - m1_new)
    p2 = jnp.exp(s2 - m2_new)
    l1_ref[...] = alpha1 * l1_ref[...] + p1.sum(axis=-1, keepdims=True)
    l2_ref[...] = alpha2 * l2_ref[...] + p2.sum(axis=-1, keepdims=True)

    # Single stacked PV matmul: [2*tq, tkv] @ [tkv, E] (half the MXU launches).
    p = jnp.concatenate([p1, p2], axis=0).astype(jnp.bfloat16)
    pv = jnp.dot(p, v, preferred_element_type=jnp.float32)        # [2*tq, E]
    a1_ref[...] = alpha1 * a1_ref[...] + pv[:tq]
    a2_ref[...] = alpha2 * a2_ref[...] + pv[tq:]
    m1_ref[...] = m1_new
    m2_ref[...] = m2_new

    @pl.when(kv_idx == pl.num_programs(3) - 1)
    def _():
        lam = lam_ref[h_idx]
        # Differential combine: softmax(A1) - lam * softmax(A2), applied to V.
        o = (a1_ref[...] * pl.reciprocal(l1_ref[...], approx=True)
             - lam * (a2_ref[...] * pl.reciprocal(l2_ref[...], approx=True)))
        # This head's contribution to the output projection ((1 - lambda_init)
        # is pre-folded into wo / bo in the wrapper).
        contrib = jnp.dot(o.astype(jnp.bfloat16), wo_ref[...],
                          preferred_element_type=jnp.float32)     # [tq, d]

        @pl.when(h_idx == 0)
        def _():
            acc_ref[...] = jnp.broadcast_to(bo_ref[...], acc_ref.shape)

        acc_ref[...] += contrib

        @pl.when(h_idx == pl.num_programs(2) - 1)
        def _():
            out_ref[...] = acc_ref[...]


def multi_head_differential_attention(x, params, lambda_init, *,
                                      q_tile_cap=256, kv_tile_cap=512,
                                      proj_tile_cap=512):
    b, N, d = x.shape
    h, _, twoE = params["wq"].shape
    E = twoE // 2
    scale = 1.0 / math.sqrt(d)

    tn = _choose_tile(N, proj_tile_cap)
    tq = _choose_tile(N, q_tile_cap)
    tkv = _choose_tile(N, kv_tile_cap)
    # Keep both v7x TensorCores fed: need >= 2 parallel (batch, q-tile) blocks.
    while b * (N // tq) < 2 and tq % 16 == 0 and N % (tq // 2) == 0:
        tq //= 2

    vmem_limit = _pick_vmem_limit()

    # Per-head scalar lambda_full (cheap glue, plain JAX).
    lam_full = (jnp.exp(jnp.sum(params["lambda_q1"] * params["lambda_k1"], axis=-1))
                - jnp.exp(jnp.sum(params["lambda_q2"] * params["lambda_k2"], axis=-1))
                + lambda_init).astype(jnp.float32)                          # [h]

    # Fused projection weights: 1/sqrt(d) folded into the Q half -> one dot per tile.
    w_all = jnp.concatenate([params["wq"] * scale, params["wk"], params["wv"]],
                            axis=-1).astype(jnp.bfloat16)                   # [h, d, 5E]
    b_all = jnp.concatenate([params["bq"] * scale, params["bk"], params["bv"]],
                            axis=-1).astype(jnp.float32)                    # [h, 1, 5E]
    # (1 - lambda_init) folded into the output projection.
    out_scale = 1.0 - float(lambda_init)
    wo_bf = (params["wo_h"] * out_scale).astype(jnp.bfloat16)               # [h, E, d]
    bo = (params["bo"] * out_scale).astype(jnp.float32)                     # [1, d]
    x_bf = x.astype(jnp.bfloat16)

    # ---------------- Kernel 1: per-head QKV projection (K/V computed once) ----------
    qs, ks, vs = pl.pallas_call(
        partial(_proj_kernel, E),
        out_shape=(jax.ShapeDtypeStruct((b, h, N, 2 * E), jnp.bfloat16),
                   jax.ShapeDtypeStruct((b, h, N, 2 * E), jnp.bfloat16),
                   jax.ShapeDtypeStruct((b, h, N, E), jnp.bfloat16)),
        grid_spec=pltpu.PrefetchScalarGridSpec(
            num_scalar_prefetch=0,
            grid=(b, h, N // tn),
            in_specs=[
                pl.BlockSpec((None, tn, d), lambda bi, hi, ni: (bi, ni, 0)),       # x tile
                pl.BlockSpec((None, d, 5 * E), lambda bi, hi, ni: (hi, 0, 0)),     # w_all
                pl.BlockSpec((None, 1, 5 * E), lambda bi, hi, ni: (hi, 0, 0)),     # b_all
            ],
            out_specs=(
                pl.BlockSpec((None, None, tn, 2 * E), lambda bi, hi, ni: (bi, hi, ni, 0)),
                pl.BlockSpec((None, None, tn, 2 * E), lambda bi, hi, ni: (bi, hi, ni, 0)),
                pl.BlockSpec((None, None, tn, E), lambda bi, hi, ni: (bi, hi, ni, 0)),
            ),
        ),
        compiler_params=pltpu.CompilerParams(
            dimension_semantics=("parallel", "parallel", "parallel"),
            vmem_limit_bytes=vmem_limit),
    )(x_bf, w_all, b_all)

    # ---------------- Kernel 2: flash-style differential attention -------------------
    out = pl.pallas_call(
        partial(_flash_diff_kernel, E),
        out_shape=jax.ShapeDtypeStruct((b, N, d), jnp.float32),
        grid_spec=pltpu.PrefetchScalarGridSpec(
            num_scalar_prefetch=0,
            grid=(b, N // tq, h, N // tkv),
            in_specs=[
                pl.BlockSpec(memory_space=pltpu.MemorySpace.SMEM),                 # lam [h]
                pl.BlockSpec((None, None, tq, 2 * E),
                             lambda bi, qi, hi, ki: (bi, hi, qi, 0)),              # Q tile
                pl.BlockSpec((None, None, tkv, 2 * E),
                             lambda bi, qi, hi, ki: (bi, hi, ki, 0)),              # K tile
                pl.BlockSpec((None, None, tkv, E),
                             lambda bi, qi, hi, ki: (bi, hi, ki, 0)),              # V tile
                pl.BlockSpec((None, E, d), lambda bi, qi, hi, ki: (hi, 0, 0)),     # wo
                pl.BlockSpec((1, d), lambda bi, qi, hi, ki: (0, 0)),               # bo
            ],
            out_specs=pl.BlockSpec((None, tq, d), lambda bi, qi, hi, ki: (bi, qi, 0)),
            scratch_shapes=[
                pltpu.VMEM((tq, d), jnp.float32),   # head accumulator
                pltpu.VMEM((tq, 1), jnp.float32),   # m1
                pltpu.VMEM((tq, 1), jnp.float32),   # l1
                pltpu.VMEM((tq, E), jnp.float32),   # a1
                pltpu.VMEM((tq, 1), jnp.float32),   # m2
                pltpu.VMEM((tq, 1), jnp.float32),   # l2
                pltpu.VMEM((tq, E), jnp.float32),   # a2
            ],
        ),
        compiler_params=pltpu.CompilerParams(
            dimension_semantics=("parallel", "parallel", "arbitrary", "arbitrary"),
            vmem_limit_bytes=vmem_limit),
    )(lam_full, qs, ks, vs, wo_bf, bo)
    return out


def reference_jax(x, params, lambda_init):
    """Pure-JAX f32 reference that mirrors the PyTorch forward exactly."""
    h, d, twoE = params["wq"].shape
    E = twoE // 2
    lam_full = (jnp.exp(jnp.sum(params["lambda_q1"] * params["lambda_k1"], axis=-1))
                - jnp.exp(jnp.sum(params["lambda_q2"] * params["lambda_k2"], axis=-1))
                + lambda_init)
    s = 1.0 / math.sqrt(d)
    outs = []
    for i in range(h):
        q = x @ params["wq"][i] + params["bq"][i, 0]
        k = x @ params["wk"][i] + params["bk"][i, 0]
        v = x @ params["wv"][i] + params["bv"][i, 0]
        q1, q2 = q[..., :E], q[..., E:]
        k1, k2 = k[..., :E], k[..., E:]
        a1 = jnp.einsum("bnd,bmd->bnm", q1, k1) * s
        a2 = jnp.einsum("bnd,bmd->bnm", q2, k2) * s
        o = (jax.nn.softmax(a1, -1) - lam_full[i] * jax.nn.softmax(a2, -1)) @ v
        outs.append(o)
    concat = jnp.concatenate(outs, axis=-1)                                 # [b, N, h*E]
    wo_full = params["wo_h"].reshape(h * E, d)
    return (concat @ wo_full + params["bo"][0]) * (1 - lambda_init)


def make_params(key, h, d, E):
    ks = jax.random.split(key, 12)
    n = lambda k, shape, scale=0.1: (scale * jax.random.normal(k, shape)).astype(jnp.float32)
    return {
        "wq": n(ks[0], (h, d, 2 * E)),
        "bq": n(ks[1], (h, 1, 2 * E)),
        "wk": n(ks[2], (h, d, 2 * E)),
        "bk": n(ks[3], (h, 1, 2 * E)),
        "wv": n(ks[4], (h, d, E)),
        "bv": n(ks[5], (h, 1, E)),
        "wo_h": n(ks[6], (h, E, d)),      # W_o^T reshaped to per-head slices
        "bo": n(ks[7], (1, d)),
        "lambda_q1": n(ks[8], (h, E)),
        "lambda_k1": n(ks[9], (h, E)),
        "lambda_q2": n(ks[10], (h, E)),
        "lambda_k2": n(ks[11], (h, E)),
    }


if __name__ == "__main__":
    b, N, d, E, h = 2, 8, 32, 16, 4
    lambda_init = 0.8

    key = jax.random.PRNGKey(0)
    kx, kp = jax.random.split(key)
    x = jax.random.normal(kx, (b, N, d), dtype=jnp.float32)
    params = make_params(kp, h, d, E)

    out = multi_head_differential_attention(x, params, lambda_init)
    out = jax.block_until_ready(out)

    ref = reference_jax(x, params, lambda_init)
    assert out.shape == (b, N, d)
    # bf16 MXU operands + approx reciprocal -> relaxed tolerance vs the f32 reference.
    err = float(jnp.max(jnp.abs(out - ref)))
    assert jnp.allclose(out, ref, atol=5e-3, rtol=5e-2), \
        f"mismatch vs JAX reference: max abs err {err:.3e}"

    print("KERNEL_OK")
</pallas_src>

<mosaic_0001>
module attributes {stable_mosaic.version = 11 : i64} {
  func.func @_proj_kernel(%arg0: i32, %arg1: i32, %arg2: i32, %arg3: memref<1x8x32xbf16, #tpu.memory_space<vmem>>, %arg4: memref<1x32x80xbf16, #tpu.memory_space<vmem>>, %arg5: memref<1x1x80xf32, #tpu.memory_space<vmem>>, %arg6: memref<1x1x8x32xbf16, #tpu.memory_space<vmem>>, %arg7: memref<1x1x8x32xbf16, #tpu.memory_space<vmem>>, %arg8: memref<1x1x8x16xbf16, #tpu.memory_space<vmem>>) attributes {dimension_semantics = [#tpu.dimension_semantics<parallel>, #tpu.dimension_semantics<parallel>, #tpu.dimension_semantics<parallel>], iteration_bounds = array<i64: 2, 4, 1>, scalar_prefetch = 0 : i64, scratch_operands = 0 : i64, tpu.core_type = #tpu.core_type<tc>, window_params = [{transform_indices = @transform_0, window_bounds = array<i64: 1, 8, 32>}, {transform_indices = @transform_1, window_bounds = array<i64: 1, 32, 80>}, {transform_indices = @transform_2, window_bounds = array<i64: 1, 1, 80>}, {transform_indices = @transform_3, window_bounds = array<i64: 1, 1, 8, 32>}, {transform_indices = @transform_4, window_bounds = array<i64: 1, 1, 8, 32>}, {transform_indices = @transform_5, window_bounds = array<i64: 1, 1, 8, 16>}]} {
    %c0 = arith.constant 0 : index
    %c0_0 = arith.constant 0 : index
    %c0_1 = arith.constant 0 : index
    %0 = vector.load %arg3[%c0, %c0_0, %c0_1] : memref<1x8x32xbf16, #tpu.memory_space<vmem>>, vector<1x8x32xbf16>
    %1 = vector.shape_cast %0 : vector<1x8x32xbf16> to vector<8x32xbf16>
    %c0_2 = arith.constant 0 : index
    %c0_3 = arith.constant 0 : index
    %c0_4 = arith.constant 0 : index
    %2 = vector.load %arg4[%c0_2, %c0_3, %c0_4] : memref<1x32x80xbf16, #tpu.memory_space<vmem>>, vector<1x32x80xbf16>
    %3 = vector.shape_cast %2 : vector<1x32x80xbf16> to vector<32x80xbf16>
    %cst = arith.constant dense<0.000000e+00> : vector<8x80xf32>
    %4 = tpu.matmul %1, %3, %cst {dimension_numbers = #tpu.dot_dimension_numbers<[1], [0], [0], [1], [0, 0, 1, 1], [], []>} : vector<8x32xbf16>, vector<32x80xbf16>, vector<8x80xf32> -> vector<8x80xf32>
    %c0_5 = arith.constant 0 : index
    %c0_6 = arith.constant 0 : index
    %c0_7 = arith.constant 0 : index
    %5 = vector.load %arg5[%c0_5, %c0_6, %c0_7] : memref<1x1x80xf32, #tpu.memory_space<vmem>>, vector<1x1x80xf32>
    %6 = vector.shape_cast %5 : vector<1x1x80xf32> to vector<1x80xf32>
    %7 = vector.broadcast %6 : vector<1x80xf32> to vector<8x80xf32>
    %8 = arith.addf %4, %7 : vector<8x80xf32>
    %9 = vector.extract_strided_slice %8 {offsets = [0, 0], sizes = [8, 32], strides = [1, 1]} : vector<8x80xf32> to vector<8x32xf32>
    %10 = arith.truncf %9 : vector<8x32xf32> to vector<8x32xbf16>
    %c0_8 = arith.constant 0 : index
    %c0_9 = arith.constant 0 : index
    %c0_10 = arith.constant 0 : index
    %c0_11 = arith.constant 0 : index
    %11 = vector.load %arg6[%c0_8, %c0_9, %c0_10, %c0_11] : memref<1x1x8x32xbf16, #tpu.memory_space<vmem>>, vector<1x1x8x32xbf16>
    %12 = vector.shape_cast %11 : vector<1x1x8x32xbf16> to vector<8x32xbf16>
    %13 = vector.shape_cast %10 : vector<8x32xbf16> to vector<1x1x8x32xbf16>
    tpu.vector_store %arg6[%c0_8, %c0_9, %c0_10, %c0_11], %13 {strides = array<i32>} : memref<1x1x8x32xbf16, #tpu.memory_space<vmem>>, vector<1x1x8x32xbf16>,
    %14 = vector.extract_strided_slice %8 {offsets = [0, 32], sizes = [8, 32], strides = [1, 1]} : vector<8x80xf32> to vector<8x32xf32>
    %15 = arith.truncf %14 : vector<8x32xf32> to vector<8x32xbf16>
    %c0_12 = arith.constant 0 : index
    %c0_13 = arith.constant 0 : index
    %c0_14 = arith.constant 0 : index
    %c0_15 = arith.constant 0 : index
    %16 = vector.load %arg7[%c0_12, %c0_13, %c0_14, %c0_15] : memref<1x1x8x32xbf16, #tpu.memory_space<vmem>>, vector<1x1x8x32xbf16>
    %17 = vector.shape_cast %16 : vector<1x1x8x32xbf16> to vector<8x32xbf16>
    %18 = vector.shape_cast %15 : vector<8x32xbf16> to vector<1x1x8x32xbf16>
    tpu.vector_store %arg7[%c0_12, %c0_13, %c0_14, %c0_15], %18 {strides = array<i32>} : memref<1x1x8x32xbf16, #tpu.memory_space<vmem>>, vector<1x1x8x32xbf16>,
    %19 = vector.extract_strided_slice %8 {offsets = [0, 64], sizes = [8, 16], strides = [1, 1]} : vector<8x80xf32> to vector<8x16xf32>
    %20 = arith.truncf %19 : vector<8x16xf32> to vector<8x16xbf16>
    %c0_16 = arith.constant 0 : index
    %c0_17 = arith.constant 0 : index
    %c0_18 = arith.constant 0 : index
    %c0_19 = arith.constant 0 : index
    %21 = vector.load %arg8[%c0_16, %c0_17, %c0_18, %c0_19] : memref<1x1x8x16xbf16, #tpu.memory_space<vmem>>, vector<1x1x8x16xbf16>
    %22 = vector.shape_cast %21 : vector<1x1x8x16xbf16> to vector<8x16xbf16>
    %23 = vector.shape_cast %20 : vector<8x16xbf16> to vector<1x1x8x16xbf16>
    tpu.vector_store %arg8[%c0_16, %c0_17, %c0_18, %c0_19], %23 {strides = array<i32>} : memref<1x1x8x16xbf16, #tpu.memory_space<vmem>>, vector<1x1x8x16xbf16>,
    return
  }
  func.func @transform_0(%arg0: i32, %arg1: i32, %arg2: i32) -> (i32, i32, i32) {
    %c0_i32 = arith.constant 0 : i32
    %c0_i32_0 = arith.constant 0 : i32
    return %arg0, %arg2, %c0_i32 : i32, i32, i32
  }
  func.func @transform_1(%arg0: i32, %arg1: i32, %arg2: i32) -> (i32, i32, i32) {
    %c0_i32 = arith.constant 0 : i32
    %c0_i32_0 = arith.constant 0 : i32
    %c0_i32_1 = arith.constant 0 : i32
    return %arg1, %c0_i32, %c0_i32_0 : i32, i32, i32
  }
  func.func @transform_2(%arg0: i32, %arg1: i32, %arg2: i32) -> (i32, i32, i32) {
    %c0_i32 = arith.constant 0 : i32
    %c0_i32_0 = arith.constant 0 : i32
    %c0_i32_1 = arith.constant 0 : i32
    return %arg1, %c0_i32, %c0_i32_0 : i32, i32, i32
  }
  func.func @transform_3(%arg0: i32, %arg1: i32, %arg2: i32) -> (i32, i32, i32, i32) {
    %c0_i32 = arith.constant 0 : i32
    %c0_i32_0 = arith.constant 0 : i32
    return %arg0, %arg1, %arg2, %c0_i32 : i32, i32, i32, i32
  }
  func.func @transform_4(%arg0: i32, %arg1: i32, %arg2: i32) -> (i32, i32, i32, i32) {
    %c0_i32 = arith.constant 0 : i32
    %c0_i32_0 = arith.constant 0 : i32
    return %arg0, %arg1, %arg2, %c0_i32 : i32, i32, i32, i32
  }
  func.func @transform_5(%arg0: i32, %arg1: i32, %arg2: i32) -> (i32, i32, i32, i32) {
    %c0_i32 = arith.constant 0 : i32
    %c0_i32_0 = arith.constant 0 : i32
    return %arg0, %arg1, %arg2, %c0_i32 : i32, i32, i32, i32
  }
}

</mosaic_0001>

<llo_original>
// kernel: tpu_custom_call.1
$region0: #{tpu_custom_call.1}
  #allocation0 [shape = 'u32[]', space=smem, size = 0x4, offset = 0x4, fixed_abs, tag = 'smem constant byte address 0x4 - core index']
  #allocation1 [shape = 'u32[144,128]{1,0:T(1,128)}', space=vmem, size = 0x12000, scoped, tag = 'internal scratch']
  %s0 = inlined_call_operand.hbm [shape: bf16[2,8,32], index: 0, kind: input, shape index: {}]
  %s1 = inlined_call_operand.hbm [shape: bf16[4,32,80], index: 1, kind: input, shape index: {}]
  %s2 = inlined_call_operand.vmem [shape: f32[4,1,80], index: 2, kind: input, shape index: {}]
  %s3 = inlined_call_operand.hbm [shape: bf16[2,4,8,32], index: 3, kind: output, shape index: {0}]
  %s4 = inlined_call_operand.hbm [shape: bf16[2,4,8,32], index: 4, kind: output, shape index: {1}]
  %s5 = inlined_call_operand.hbm [shape: bf16[2,4,8,16], index: 5, kind: output, shape index: {2}]
  %6 = xla_tuple %s3, %s4, %s5
  %s7 = sld [smem:[#allocation0]]
  $region69: #{tpu_custom_call.1} parent=0
    _
  %s9 = ssub.s32 1, %s7
  %s10 = scalar_select 0, %s9, %s7
  $region1: #{tpu_custom_call.1} parent=0
    #allocation2 [shape = 'u8[4096]{0}', space=vmem, size = 0x1000, scoped, tag = 'input window, operand 0']
    #allocation3 [shape = 's32[2]{0}', space=sflag, size = 0x8, scoped, tag = 'scoped memory for tpu_custom_call.1']
    #allocation4 [shape = 's32[2]{0}', space=sflag, size = 0x8, scoped, tag = 'scoped memory for tpu_custom_call.1']
    #allocation5 [shape = 'u8[16384]{0}', space=vmem, size = 0x4000, scoped, tag = 'input window, operand 1']
    #allocation6 [shape = 's32[2]{0}', space=sflag, size = 0x8, scoped, tag = 'scoped memory for tpu_custom_call.1']
    #allocation7 [shape = 'u8[4096]{0}', space=vmem, size = 0x1000, scoped, tag = 'output window, operand 0']
    #allocation8 [shape = 'u8[4096]{0}', space=vmem, size = 0x1000, scoped, tag = 'output window, operand 1']
    #allocation9 [shape = 's32[2]{0}', space=sflag, size = 0x8, scoped, tag = 'scoped memory for tpu_custom_call.1']
    #allocation10 [shape = 'u8[4096]{0}', space=vmem, size = 0x1000, scoped, tag = 'output window, operand 2']
    %11 = vsyncpa [#allocation3], 0
    %s12 = scalar_lea.sflag [#allocation3], 1
    %13 = vsyncpa %s12, 0
    %14 = vsyncpa [#allocation6], 0
    %s15 = scalar_lea.sflag [#allocation6], 1
    %16 = vsyncpa %s15, 0
    %17 = vsyncpa [#allocation4], 0
    %s18 = scalar_lea.sflag [#allocation4], 1
    %19 = vsyncpa %s18, 0
    %20 = vsyncpa [#allocation9], 0
    %s21 = scalar_lea.sflag [#allocation9], 1
    %22 = vsyncpa %s21, 0
    loop: start=0, step=1, limit=10
    $region2: #{tpu_custom_call.1} parent=1 // loop_pre_header
      _
    $region3: #{tpu_custom_call.1} parent=1 // loop_header
      %s24 = sphi 0, %s28
      %p25 = scmp.ge.s32.totalorder %s24, 10
      %s31 = sphi 0, %s50
      %s32 = sphi 0, %s46
      %s33 = sphi 0, %s42
      %s34 = sphi 0, %s31
      %s35 = sphi 0, %s32
      %s36 = sphi 0, %s33
      %s37 = sphi 0, %s34
      %s38 = sphi 0, %s35
      %s39 = sphi 0, %s36
      %s55 = sphi 0, %s57
      %s58 = sphi 0, %s55
      %s59 = sphi 0, %s58
      %s75 = sphi 0, %s59
      %s81 = sphi 0, %s83
      %s84 = sphi 0, %s81
      %s85 = sphi 0, %s84
      %s101 = sphi 0, %s85
      %s107 = sphi 0, %s109
      %s110 = sphi 0, %s107
      %s111 = sphi 0, %s110
      %s127 = sphi 0, %s111
      %s137 = sphi 0, %s139
      %s140 = sphi 0, %s137
      %s141 = sphi 0, %s140
      %s157 = sphi 0, %s141
      %s167 = sphi 0, %s169
      %s170 = sphi 0, %s167
      %s171 = sphi 0, %s170
      %s187 = sphi 0, %s171
      %s197 = sphi 0, %s199
      %s200 = sphi 0, %s197
      %s201 = sphi 0, %s200
      %s217 = sphi 0, %s201
    $region4: #{tpu_custom_call.1} parent=1 // loop_header_branch
      %27 = sbr.rel (%p25) target = $region8
    $region5: #{tpu_custom_call.1} parent=1 // loop_body
      %s29 = ssub.s32 %s24, 1
      %s30 = ssub.s32 %s24, 2
      %s40 = sadd.s32 1, %s33
      %p41 = scmp.ge.s32.totalorder %s40, 1
      %s42 = scalar_select %p41, 0, %s40
      %s43 = sadd.s32 1, %s32
      %s44 = scalar_select %p41, %s43, %s32
      %p45 = scmp.ge.s32.totalorder %s44, 4
      %s46 = scalar_select %p45, 0, %s44
      %s47 = sadd.s32 1, %s31
      %s48 = scalar_select %p45, %s47, %s31
      %p49 = scmp.ge.s32.totalorder %s48, 2
      %s50 = scalar_select %p49, 0, %s48
      %s51 = ssub.s32 %s31, %s50
      %s52 = ssub.s32 %s33, %s42
      %s53 = sor.u32 %s51, %s52
      %p54 = scmp.eq.s32.totalorder %s53, 0
      %s56 = sadd.s32 %s55, 1
      %s57 = scalar_select %p54, %s55, %s56
      %p60 = pneg %p54
      %p61 = scmp.eq.s32.totalorder %s24, 7
      %p62 = por %p60, %p61
      %p63 = scmp.ne.s32.totalorder %s55, %s58
      %p64 = scmp.eq.s32.totalorder %s24, 0
      %p65 = por %p63, %p64
      %p66 = scmp.ne.s32.totalorder %s55, %s58
      %p67 = scmp.eq.s32.totalorder %s29, 7
      %p68 = por %p66, %p67
      %p69 = scmp.ne.s32.totalorder %s58, %s59
      %p70 = scmp.eq.s32.totalorder %s29, 0
      %p71 = por %p69, %p70
      %p72 = scmp.ne.s32.totalorder %s58, %s59
      %p73 = scmp.eq.s32.totalorder %s30, 7
      %p74 = por %p72, %p73
      %p76 = scmp.ne.s32.totalorder %s59, %s75
      %p77 = scmp.eq.s32.totalorder %s30, 0
      %p78 = por %p76, %p77
      %s79 = ssub.s32 %s32, %s46
      %p80 = scmp.eq.s32.totalorder %s79, 0
      %s82 = sadd.s32 %s81, 1
      %s83 = scalar_select %p80, %s81, %s82
      %p86 = pneg %p80
      %p87 = scmp.eq.s32.totalorder %s24, 7
      %p88 = por %p86, %p87
      %p89 = scmp.ne.s32.totalorder %s81, %s84
      %p90 = scmp.eq.s32.totalorder %s24, 0
      %p91 = por %p89, %p90
      %p92 = scmp.ne.s32.totalorder %s81, %s84
      %p93 = scmp.eq.s32.totalorder %s29, 7
      %p94 = por %p92, %p93
      %p95 = scmp.ne.s32.totalorder %s84, %s85
      %p96 = scmp.eq.s32.totalorder %s29, 0
      %p97 = por %p95, %p96
      %p98 = scmp.ne.s32.totalorder %s84, %s85
      %p99 = scmp.eq.s32.totalorder %s30, 7
      %p100 = por %p98, %p99
      %p102 = scmp.ne.s32.totalorder %s85, %s101
      %p103 = scmp.eq.s32.totalorder %s30, 0
      %p104 = por %p102, %p103
      %s105 = ssub.s32 %s32, %s46
      %p106 = scmp.eq.s32.totalorder %s105, 0
      %s108 = sadd.s32 %s107, 1
      %s109 = scalar_select %p106, %s107, %s108
      %p112 = pneg %p106
      %p113 = scmp.eq.s32.totalorder %s24, 7
      %p114 = por %p112, %p113
      %p115 = scmp.ne.s32.totalorder %s107, %s110
      %p116 = scmp.eq.s32.totalorder %s24, 0
      %p117 = por %p115, %p116
      %p118 = scmp.ne.s32.totalorder %s107, %s110
      %p119 = scmp.eq.s32.totalorder %s29, 7
      %p120 = por %p118, %p119
      %p121 = scmp.ne.s32.totalorder %s110, %s111
      %p122 = scmp.eq.s32.totalorder %s29, 0
      %p123 = por %p121, %p122
      %p124 = scmp.ne.s32.totalorder %s110, %s111
      %p125 = scmp.eq.s32.totalorder %s30, 7
      %p126 = por %p124, %p125
      %p128 = scmp.ne.s32.totalorder %s111, %s127
      %p129 = scmp.eq.s32.totalorder %s30, 0
      %p130 = por %p128, %p129
      %s131 = ssub.s32 %s31, %s50
      %s132 = ssub.s32 %s32, %s46
      %s133 = sor.u32 %s131, %s132
      %s134 = ssub.s32 %s33, %s42
      %s135 = sor.u32 %s133, %s134
      %p136 = scmp.eq.s32.totalorder %s135, 0
      %s138 = sadd.s32 %s137, 1
      %s139 = scalar_select %p136, %s137, %s138
      %p142 = pneg %p136
      %p143 = scmp.eq.s32.totalorder %s24, 7
      %p144 = por %p142, %p143
      %p145 = scmp.ne.s32.totalorder %s137, %s140
      %p146 = scmp.eq.s32.totalorder %s24, 0
      %p147 = por %p145, %p146
      %p148 = scmp.ne.s32.totalorder %s137, %s140
      %p149 = scmp.eq.s32.totalorder %s29, 7
      %p150 = por %p148, %p149
      %p151 = scmp.ne.s32.totalorder %s140, %s141
      %p152 = scmp.eq.s32.totalorder %s29, 0
      %p153 = por %p151, %p152
      %p154 = scmp.ne.s32.totalorder %s140, %s141
      %p155 = scmp.eq.s32.totalorder %s30, 7
      %p156 = por %p154, %p155
      %p158 = scmp.ne.s32.totalorder %s141, %s157
      %p159 = scmp.eq.s32.totalorder %s30, 0
      %p160 = por %p158, %p159
      %s161 = ssub.s32 %s31, %s50
      %s162 = ssub.s32 %s32, %s46
      %s163 = sor.u32 %s161, %s162
      %s164 = ssub.s32 %s33, %s42
      %s165 = sor.u32 %s163, %s164
      %p166 = scmp.eq.s32.totalorder %s165, 0
      %s168 = sadd.s32 %s167, 1
      %s169 = scalar_select %p166, %s167, %s168
      %p172 = pneg %p166
      %p173 = scmp.eq.s32.totalorder %s24, 7
      %p174 = por %p172, %p173
      %p175 = scmp.ne.s32.totalorder %s167, %s170
      %p176 = scmp.eq.s32.totalorder %s24, 0
      %p177 = por %p175, %p176
      %p178 = scmp.ne.s32.totalorder %s167, %s170
      %p179 = scmp.eq.s32.totalorder %s29, 7
      %p180 = por %p178, %p179
      %p181 = scmp.ne.s32.totalorder %s170, %s171
      %p182 = scmp.eq.s32.totalorder %s29, 0
      %p183 = por %p181, %p182
      %p184 = scmp.ne.s32.totalorder %s170, %s171
      %p185 = scmp.eq.s32.totalorder %s30, 7
      %p186 = por %p184, %p185
      %p188 = scmp.ne.s32.totalorder %s171, %s187
      %p189 = scmp.eq.s32.totalorder %s30, 0
      %p190 = por %p188, %p189
      %s191 = ssub.s32 %s31, %s50
      %s192 = ssub.s32 %s32, %s46
      %s193 = sor.u32 %s191, %s192
      %s194 = ssub.s32 %s33, %s42
      %s195 = sor.u32 %s193, %s194
      %p196 = scmp.eq.s32.totalorder %s195, 0
      %s198 = sadd.s32 %s197, 1
      %s199 = scalar_select %p196, %s197, %s198
      %p202 = pneg %p196
      %p203 = scmp.eq.s32.totalorder %s24, 7
      %p204 = por %p202, %p203
      %p205 = scmp.ne.s32.totalorder %s197, %s200
      %p206 = scmp.eq.s32.totalorder %s24, 0
      %p207 = por %p205, %p206
      %p208 = scmp.ne.s32.totalorder %s197, %s200
      %p209 = scmp.eq.s32.totalorder %s29, 7
      %p210 = por %p208, %p209
      %p211 = scmp.ne.s32.totalorder %s200, %s201
      %p212 = scmp.eq.s32.totalorder %s29, 0
      %p213 = por %p211, %p212
      %p214 = scmp.ne.s32.totalorder %s200, %s201
      %p215 = scmp.eq.s32.totalorder %s30, 7
      %p216 = por %p214, %p215
      %p218 = scmp.ne.s32.totalorder %s201, %s217
      %p219 = scmp.eq.s32.totalorder %s30, 0
      %p220 = por %p218, %p219
      %p221 = scmp.le.s32.totalorder 1, %s24
      %p222 = scmp.lt.s32.totalorder %s24, 9
      %p223 = pnand %p221, %p222
      %p224 = pneg %p223
      // Predicated region
      $region9: #{tpu_custom_call.1} parent=5 // pred_check
        _
      $region10: #{tpu_custom_call.1} parent=5 // pred_check_branch
        %226 = sbr.rel (%p223) target = $region12
      $region11: #{tpu_custom_call.1} parent=5 // pred_region
        %s227 = ssub.s32 %s24, 1
      $region12: #{tpu_custom_call.1} parent=5 // pred_fallthru
        _
      %p228 = scmp.lt.s32.totalorder %s24, 8
      // Predicated region
      $region13: #{tpu_custom_call.1} parent=5 // pred_check
        %p229 = pneg %p228
      $region14: #{tpu_custom_call.1} parent=5 // pred_check_branch
        %231 = sbr.rel (%p229) target = $region16
      $region15: #{tpu_custom_call.1} parent=5 // pred_region
        // Predicated region
        $region17: #{tpu_custom_call.1} parent=15 // pred_check
          %p232 = pneg %p65
        $region18: #{tpu_custom_call.1} parent=15 // pred_check_branch
          %234 = sbr.rel (%p232) target = $region20
        $region19: #{tpu_custom_call.1} parent=15 // pred_region
          %s235 = sand.u32 %s55, 1
          %s236 = scalar_lea.sflag [#allocation3], %s235
          %s237 = sand.u32 %s55, 1
          %s238 = smul.addr %s237, 4
          %s239 = scalar_lea.vmem [#allocation2], %s238
          %s241 = ssub.s32 64, 64
          %242 = vsyncadd %s236, %s241
          %s243 = sadd.s32 %s33, %s31
          %s244 = smul.addr %s243, 64
          %s245 = scalar_lea.hbm %s0, %s244
          %s247 = sshll.u32 %s239, 4
          %s248 = int_to_ptr.vmem [resolvable:$true] %s247
          %250 = dma.hbm_to_vmem [thread:$0]  %s245, 64, %s248, %s236
        $region20: #{tpu_custom_call.1} parent=15 // pred_fallthru
          _
        // Predicated region
        $region21: #{tpu_custom_call.1} parent=15 // pred_check
          %p251 = pneg %p91
        $region22: #{tpu_custom_call.1} parent=15 // pred_check_branch
          %253 = sbr.rel (%p251) target = $region24
        $region23: #{tpu_custom_call.1} parent=15 // pred_region
          %s254 = sand.u32 %s81, 1
          %s255 = scalar_lea.sflag [#allocation6], %s254
          %s256 = sand.u32 %s81, 1
          %s257 = smul.addr %s256, 16
          %s258 = scalar_lea.vmem [#allocation5], %s257
          %s260 = ssub.s32 256, 256
          %261 = vsyncadd %s255, %s260
          %s262 = smul.addr %s32, 4
          %s263 = smul.addr %s262, 64
          %s264 = scalar_lea.hbm %s1, %s263
          %s265 = sshll.u32 %s258, 4
          %s266 = int_to_ptr.vmem [resolvable:$true] %s265
          %271 = dma.hbm_to_vmem [thread:$0]  %s264, 256, %s266, %s255, 64, 64, 4
        $region24: #{tpu_custom_call.1} parent=15 // pred_fallthru
          _
        // Predicated region
        $region25: #{tpu_custom_call.1} parent=15 // pred_check
          %p272 = pneg %p117
        $region26: #{tpu_custom_call.1} parent=15 // pred_check_branch
          %274 = sbr.rel (%p272) target = $region28
        $region27: #{tpu_custom_call.1} parent=15 // pred_region
          %p275 = scmp.lt.s32.totalorder %s32, 3
          %s276 = scalar_select %p275, %s32, 3
          %s277 = scalar_lea.vmem %s2, %s276
        $region28: #{tpu_custom_call.1} parent=15 // pred_fallthru
          _
      $region16: #{tpu_custom_call.1} parent=5 // pred_fallthru
        _
      %p278 = scmp.le.s32.totalorder 1, %s24
      %p279 = scmp.lt.s32.totalorder %s24, 9
      %p280 = pnand %p278, %p279
      %p281 = pneg %p280
      // Predicated region
      $region29: #{tpu_custom_call.1} parent=5 // pred_check
        _
      $region30: #{tpu_custom_call.1} parent=5 // pred_check_branch
        %283 = sbr.rel (%p280) target = $region32
      $region31: #{tpu_custom_call.1} parent=5 // pred_region
        %s284 = ssub.s32 %s24, 1
        %s285 = sand.u32 %s58, 1
        %s286 = scalar_lea.sflag [#allocation3], %s285
        %s287 = sand.u32 %s58, 1
        %s288 = smul.addr %s287, 4
        %s289 = scalar_lea.vmem [#allocation2], %s288
        // Predicated region
        $region33: #{tpu_custom_call.1} parent=31 // pred_check
          %p290 = pneg %p71
        $region34: #{tpu_custom_call.1} parent=31 // pred_check_branch
          %292 = sbr.rel (%p290) target = $region36
        $region35: #{tpu_custom_call.1} parent=31 // pred_region
          %293 = dma.done %s286, 64
        $region36: #{tpu_custom_call.1} parent=31 // pred_fallthru
          _
        %s294 = sand.u32 %s84, 1
        %s295 = scalar_lea.sflag [#allocation6], %s294
        %s296 = sand.u32 %s84, 1
        %s297 = smul.addr %s296, 16
        %s298 = scalar_lea.vmem [#allocation5], %s297
        // Predicated region
        $region37: #{tpu_custom_call.1} parent=31 // pred_check
          %p299 = pneg %p97
        $region38: #{tpu_custom_call.1} parent=31 // pred_check_branch
          %301 = sbr.rel (%p299) target = $region40
        $region39: #{tpu_custom_call.1} parent=31 // pred_region
          %302 = dma.done %s295, 256
        $region40: #{tpu_custom_call.1} parent=31 // pred_fallthru
          _
        %s303 = sand.u32 %s58, 1
        %s304 = scalar_lea.sflag [#allocation3], %s303
        %s305 = sand.u32 %s58, 1
        %s306 = smul.addr %s305, 4
        %s307 = scalar_lea.vmem [#allocation2], %s306
        %p308 = pneg %p71
        %p309 = pneg %p68
        %s310 = sand.u32 %s84, 1
        %s311 = scalar_lea.sflag [#allocation6], %s310
        %s312 = sand.u32 %s84, 1
        %s313 = smul.addr %s312, 16
        %s314 = scalar_lea.vmem [#allocation5], %s313
        %p315 = pneg %p97
        %p316 = pneg %p94
        %p317 = scmp.lt.s32.totalorder %s35, 3
        %s318 = scalar_select %p317, %s35, 3
        %s319 = scalar_lea.vmem %s2, %s318
        %p320 = pneg %p123
        %p321 = pneg %p120
        %p322 = pneg %p153
        %p323 = pneg %p150
        %s324 = sand.u32 %s140, 1
        %s325 = scalar_lea.sflag [#allocation4], %s324
        %s326 = sand.u32 %s140, 1
        %s327 = smul.addr %s326, 4
        %s328 = scalar_lea.vmem [#allocation7], %s327
        %p329 = pneg %p183
        %p330 = pneg %p180
        %s331 = sand.u32 %s29, 1
        %s332 = scalar_lea.sflag [#allocation9], %s331
        %s333 = sand.u32 %s170, 1
        %s334 = smul.addr %s333, 4
        %s335 = scalar_lea.vmem [#allocation8], %s334
        %p336 = pneg %p213
        %p337 = pneg %p210
        %s338 = sand.u32 %s29, 1
        %s339 = scalar_lea.sflag [#allocation9], %s338
        %s340 = sand.u32 %s200, 1
        %s341 = smul.addr %s340, 4
        %s342 = scalar_lea.vmem [#allocation10], %s341
        %p343 = scmp.lt.s32.totalorder %s35, 3
        %s344 = scalar_select %p343, %s35, 3
        %s345 = scalar_lea.vmem %s2, %s344
        %v347 = vld [vmem:[%s289] sm:$0xf]
        %v348 = vld [vmem:[%s298] sm:$0xf]
        %v349 = vld [vmem:[%s298 + $0x4] sm:$0xf]
        %v350 = vld [vmem:[%s298 + $0x8] sm:$0xf]
        %v351 = vld [vmem:[%s298 + $0xc] sm:$0xf]
        %v352 = vld [vmem:[%s345] sm:$0x1]
        %v354 = vlaneseq
        %v355 = vshrl.u32 %v354, 7
        %v356 = vsub.s32 0, %v355
        %v357 = vrot.slane %v352, %v356
        %v363 = vunpack.c.l.b16 %v348
        %v364 = vunpack.c.l.b16 %v349
        %v365 = vunpack.c.l.b16 %v350
        %v366 = vunpack.c.l.b16 %v351
        %v367 = vpack.c.b16 %v364, %v363
        %v368 = vpack.c.b16 %v366, %v365
        %vm371 = vcmask 261120
        %v373 = vsel %vm371, %v347, 0
        %375 = vmatprep.subr.bf16.mxu0 0
        %376 = vmatpush1.bf16.msra.mxu0 %v367
        %377 = vmatprep.subr.bf16.mxu0 0
        %378 = vmatpush1.bf16.msra.mxu0 %v368
        %379 = vmatprep.subr.bf16.mxu0 0
        %380 = vmatpush1.bf16.msra.mxu0 0
        %381 = vmatprep.subr.bf16.mxu0 0
        %382 = vmatpush1.bf16.msra.mxu0 0
        %383 = vmatprep.subr.bf16.mxu0 0
        %384 = vmatpush1.bf16.msra.mxu0 0
        %385 = vmatprep.subr.bf16.mxu0 0
        %386 = vmatpush1.bf16.msra.mxu0 0
        %387 = vmatprep.subr.bf16.mxu0 0
        %388 = vmatpush1.bf16.msra.mxu0 0
        %389 = vmatprep.subr.bf16.mxu0 0
        %390 = vmatpush1.bf16.msra.mxu0 0
        %391 = vmatprep.subr.bf16.mxu0 0
        %392 = vmatpush1.bf16.msra.mxu0 0
        %393 = vmatprep.subr.bf16.mxu0 0
        %394 = vmatpush1.bf16.msra.mxu0 0
        %395 = vmatprep.subr.bf16.mxu0 0
        %396 = vmatpush1.bf16.msra.mxu0 0
        %397 = vmatprep.subr.bf16.mxu0 0
        %398 = vmatpush1.bf16.msra.mxu0 0
        %399 = vmatprep.subr.bf16.mxu0 0
        %400 = vmatpush1.bf16.msra.mxu0 0
        %401 = vmatprep.subr.bf16.mxu0 0
        %402 = vmatpush1.bf16.msra.mxu0 0
        %403 = vmatprep.subr.bf16.mxu0 0
        %404 = vmatpush1.bf16.msra.mxu0 0
        %405 = vmatprep.subr.bf16.mxu0 0
        %406 = vmatpush1.bf16.msra.mxu0 0
        %407 = vmatprep.mubr.bf16.mxu0 0
        %408 = vmatmul.mubr.bf16.gmra.mrb[0].mxu0 %v373
        %v409 = vpop.f32.mrb[0].mxu0
        %v410 = vadd.f32 %v357, %v409
        %v411 = vpop.f32.mrb[0].mxu0
        %v412 = vpop.f32.mrb[0].mxu0
        %v413 = vpop.f32.mrb[0].mxu0
        %414 = vdwg.mxu0
        %v415 = vpack.c.bf16 %v410, %v410
        %vm416 = vcmask 257024
        %417 = vst.msk [vmem:[%s328] sm:$0xf] %vm416, %v415
        %v419 = vunpack.c.l.b16 %v415
        %v420 = vpack.c.b16 %v419, %v419
        %421 = vrot.lane.b32.xlu0 %v420, 96
        %v422 = vpop.permute.xlu0 %421
        %424 = vst.msk [vmem:[%s335] sm:$0xf] %vm416, %v422
        %425 = vrot.lane.b32.xlu0 %v420, 64
        %v426 = vpop.permute.xlu0 %425
        %vm428 = vcmask 125952
        %429 = vst.msk [vmem:[%s342] sm:$0xf] %vm428, %v426
        %s430 = sand.u32 %s140, 1
        %s431 = scalar_lea.sflag [#allocation4], %s430
        %s432 = sand.u32 %s140, 1
        %s433 = smul.addr %s432, 4
        %s434 = scalar_lea.vmem [#allocation7], %s433
        %s435 = sand.u32 %s29, 1
        %s436 = scalar_lea.sflag [#allocation9], %s435
        %s437 = sand.u32 %s170, 1
        %s438 = smul.addr %s437, 4
        %s439 = scalar_lea.vmem [#allocation8], %s438
        %s440 = sand.u32 %s29, 1
        %s441 = scalar_lea.sflag [#allocation9], %s440
        %s442 = sand.u32 %s200, 1
        %s443 = smul.addr %s442, 4
        %s444 = scalar_lea.vmem [#allocation10], %s443
        // Predicated region
        $region41: #{tpu_custom_call.1} parent=31 // pred_check
          %p445 = pneg %p150
        $region42: #{tpu_custom_call.1} parent=31 // pred_check_branch
          %447 = sbr.rel (%p445) target = $region44
        $region43: #{tpu_custom_call.1} parent=31 // pred_region
          %s449 = ssub.s32 64, 64
          %450 = vsyncadd %s431, %s449
          %s451 = sadd.s32 %s36, %s35
          %s452 = smul.addr %s34, 4
          %s453 = sadd.s32 %s451, %s452
          %s454 = smul.addr %s453, 64
          %s455 = scalar_lea.hbm %s3, %s454
          %s457 = sshll.u32 %s434, 4
          %s458 = int_to_ptr.vmem [resolvable:$true] %s457
          %460 = dma.vmem_to_hbm [thread:$0]  %s458, 64, %s455, %s431
        $region44: #{tpu_custom_call.1} parent=31 // pred_fallthru
          _
        // Predicated region
        $region45: #{tpu_custom_call.1} parent=31 // pred_check
          %p461 = pneg %p180
        $region46: #{tpu_custom_call.1} parent=31 // pred_check_branch
          %463 = sbr.rel (%p461) target = $region48
        $region47: #{tpu_custom_call.1} parent=31 // pred_region
          %s465 = ssub.s32 64, 64
          %466 = vsyncadd %s436, %s465
          %s467 = sadd.s32 %s36, %s35
          %s468 = smul.addr %s34, 4
          %s469 = sadd.s32 %s467, %s468
          %s470 = smul.addr %s469, 64
          %s471 = scalar_lea.hbm %s4, %s470
          %s473 = sshll.u32 %s439, 4
          %s474 = int_to_ptr.vmem [resolvable:$true] %s473
          %476 = dma.vmem_to_hbm [thread:$0]  %s474, 64, %s471, %s436
        $region48: #{tpu_custom_call.1} parent=31 // pred_fallthru
          _
        // Predicated region
        $region49: #{tpu_custom_call.1} parent=31 // pred_check
          %p477 = pneg %p210
        $region50: #{tpu_custom_call.1} parent=31 // pred_check_branch
          %479 = sbr.rel (%p477) target = $region52
        $region51: #{tpu_custom_call.1} parent=31 // pred_region
          %s481 = ssub.s32 64, 64
          %482 = vsyncadd %s441, %s481
          %s483 = sadd.s32 %s36, %s35
          %s484 = smul.addr %s34, 4
          %s485 = sadd.s32 %s483, %s484
          %s486 = smul.addr %s485, 64
          %s487 = scalar_lea.hbm %s5, %s486
          %s489 = sshll.u32 %s444, 4
          %s490 = int_to_ptr.vmem [resolvable:$true] %s489
          %492 = dma.vmem_to_hbm [thread:$0]  %s490, 64, %s487, %s441
        $region52: #{tpu_custom_call.1} parent=31 // pred_fallthru
          _
      $region32: #{tpu_custom_call.1} parent=5 // pred_fallthru
        _
      %p493 = scmp.le.s32.totalorder 2, %s24
      // Predicated region
      $region53: #{tpu_custom_call.1} parent=5 // pred_check
        %p494 = pneg %p493
      $region54: #{tpu_custom_call.1} parent=5 // pred_check_branch
        %496 = sbr.rel (%p494) target = $region56
      $region55: #{tpu_custom_call.1} parent=5 // pred_region
        %s497 = ssub.s32 %s24, 2
        // Predicated region
        $region57: #{tpu_custom_call.1} parent=55 // pred_check
          %p498 = pneg %p156
        $region58: #{tpu_custom_call.1} parent=55 // pred_check_branch
          %500 = sbr.rel (%p498) target = $region60
        $region59: #{tpu_custom_call.1} parent=55 // pred_region
          %s501 = sand.u32 %s141, 1
          %s502 = scalar_lea.sflag [#allocation4], %s501
          %s503 = sand.u32 %s141, 1
          %s504 = smul.addr %s503, 4
          %s505 = scalar_lea.vmem [#allocation7], %s504
          %506 = dma.done %s502, 64
        $region60: #{tpu_custom_call.1} parent=55 // pred_fallthru
          _
        // Predicated region
        $region61: #{tpu_custom_call.1} parent=55 // pred_check
          %p507 = pneg %p186
        $region62: #{tpu_custom_call.1} parent=55 // pred_check_branch
          %509 = sbr.rel (%p507) target = $region64
        $region63: #{tpu_custom_call.1} parent=55 // pred_region
          %s510 = sand.u32 %s30, 1
          %s511 = scalar_lea.sflag [#allocation9], %s510
          %s512 = sand.u32 %s171, 1
          %s513 = smul.addr %s512, 4
          %s514 = scalar_lea.vmem [#allocation8], %s513
          %515 = dma.done %s511, 64
        $region64: #{tpu_custom_call.1} parent=55 // pred_fallthru
          _
        // Predicated region
        $region65: #{tpu_custom_call.1} parent=55 // pred_check
          %p516 = pneg %p216
        $region66: #{tpu_custom_call.1} parent=55 // pred_check_branch
          %518 = sbr.rel (%p516) target = $region68
        $region67: #{tpu_custom_call.1} parent=55 // pred_region
          %s519 = sand.u32 %s30, 1
          %s520 = scalar_lea.sflag [#allocation9], %s519
          %s521 = sand.u32 %s201, 1
          %s522 = smul.addr %s521, 4
          %s523 = scalar_lea.vmem [#allocation10], %s522
          %524 = dma.done %s520, 64
        $region68: #{tpu_custom_call.1} parent=55 // pred_fallthru
          _
      $region56: #{tpu_custom_call.1} parent=5 // pred_fallthru
        _
    $region6: #{tpu_custom_call.1} parent=1 // loop_footer
      %s28 = sadd.s32 1, %s24
    $region7: #{tpu_custom_call.1} parent=1 // loop_footer_branch
      %23 = sbr.rel target = $region3
    $region8: #{tpu_custom_call.1} parent=1 // loop_exit
      _
    %525 = vsyncpa [#allocation3], 1
    %s526 = scalar_lea.sflag [#allocation3], 1
    %527 = vsyncpa %s526, 1
    %528 = vsyncpa [#allocation6], 1
    %s529 = scalar_lea.sflag [#allocation6], 1
    %530 = vsyncpa %s529, 1
    %531 = vsyncpa [#allocation4], 1
    %s532 = scalar_lea.sflag [#allocation4], 1
    %533 = vsyncpa %s532, 1
    %534 = vsyncpa [#allocation9], 1
    %s535 = scalar_lea.sflag [#allocation9], 1
    %536 = vsyncpa %s535, 1

</llo_original>
